<compile_context>
chip_gen: v6e
topology: v6e:2x2x1
jax: 0.10.0
libtpu: 0.0.40
codegen_flags: <defaults>
</compile_context>

<pallas_src>
import jax
import jax.numpy as jnp
from jax.experimental import pallas as pl
from jax.experimental.pallas import tpu as pltpu


# --------------------------------------------------------------------------
# Pallas kernel: materialize torch.split(x, 1, dim=1) -> (x1, x2)
# --------------------------------------------------------------------------
def _split_channels_kernel(x_ref, x1_ref, x2_ref):
    # x_ref  : (b_tile, 2*HW)  -- channel folded into the lane axis
    # x1_ref : (b_tile, HW)
    # x2_ref : (b_tile, HW)
    # HW is a multiple of 128, so both lane slices are 128-aligned, dense,
    # full-vreg copies: no sublane strides, no XLU relayout, no masked vst.
    hw = x1_ref.shape[-1]
    x1_ref[...] = x_ref[:, :hw]
    x2_ref[...] = x_ref[:, hw:]


def _sublane_multiple(dtype):
    # 8 for f32, 16 for bf16, 32 for int8: sub-32-bit dtypes pack on sublanes.
    itemsize = jnp.dtype(dtype).itemsize
    return max(8, 32 // max(itemsize, 1))


def _pick_batch_tile(n, row_bytes, dtype, target_bytes=4 << 20):
    """Rows of x_flat per grid step.

    * sublane-aligned (unless n itself is smaller, then the full dim),
    * sized so the input block is <= ~4 MiB (double-buffered footprint
      2*(in + 2*out) <= ~16 MiB, comfortable on v7x's 64 MiB VMEM),
    * capped so the grid has >= 2 steps when n allows it, letting both
      v7x TensorCores issue DMAs (neutral on single-TC v5e/v6e).
    """
    sub = _sublane_multiple(dtype)
    if n <= sub:
        return n
    b = int(target_bytes // max(row_bytes, 1))
    b = max(sub, (b // sub) * sub)
    half_aligned = ((pl.cdiv(n, 2) + sub - 1) // sub) * sub
    b = min(b, half_aligned)
    return min(b, n)


def split_channels_pallas(x, *, force_pallas=False, min_pallas_bytes=1 << 21):
    """Materialized torch.split(x, 1, dim=1) for a 2-channel NCHW tensor.

    Returns (x1, x2), each of shape (N, 1, H, W).  Falls back to plain XLA
    slices (already at HBM roofline) for tiny inputs, for H*W not a multiple
    of 128 (second lane slice would be unaligned), or when even the smallest
    sublane-aligned block would blow the VMEM budget.
    """
    n, c, h, w = x.shape
    assert c == 2, "torch.split(x, 1, dim=1) -> (x1, x2) requires 2 channels"
    hw = h * w
    itemsize = jnp.dtype(x.dtype).itemsize
    total_bytes = n * 2 * hw * itemsize

    sub = _sublane_multiple(x.dtype)
    # Double-buffered footprint of the *smallest* legal tile (sub rows):
    min_footprint = 2 * (sub * 2 * hw + 2 * sub * hw) * itemsize
    use_pallas = (
        hw % 128 == 0
        and min_footprint <= (24 << 20)
        and (force_pallas or total_bytes >= min_pallas_bytes)
    )
    if not use_pallas:
        # Tiny / awkward inputs: pallas_call launch + per-step overhead would
        # dominate; XLA's fused contiguous slice copy is already optimal.
        return x[:, 0:1], x[:, 1:2]

    row_bytes = 2 * hw * itemsize
    b_tile = _pick_batch_tile(n, row_bytes, x.dtype)
    grid = (pl.cdiv(n, b_tile),)

    # Fold the channel dim into the lane axis: row-major contiguous reshape,
    # no data movement.  Sublane axis of every block is the batch tile.
    x_flat = x.reshape(n, 2 * hw)

    in_block = b_tile * 2 * hw * itemsize
    out_block = b_tile * hw * itemsize
    footprint = 2 * (in_block + 2 * out_block)          # double-buffered
    vmem_limit = min(max(footprint + footprint // 4, 8 << 20), 32 << 20)

    x1, x2 = pl.pallas_call(
        _split_channels_kernel,
        out_shape=(
            jax.ShapeDtypeStruct((n, hw), x.dtype),
            jax.ShapeDtypeStruct((n, hw), x.dtype),
        ),
        grid=grid,
        in_specs=[pl.BlockSpec((b_tile, 2 * hw), lambda i: (i, 0))],
        out_specs=(
            pl.BlockSpec((b_tile, hw), lambda i: (i, 0)),
            pl.BlockSpec((b_tile, hw), lambda i: (i, 0)),
        ),
        compiler_params=pltpu.CompilerParams(
            # Independent per-batch-tile work: shard across v7x's two
            # TensorCores; neutral on single-TC v5e/v6e.
            dimension_semantics=("parallel",),
            vmem_limit_bytes=vmem_limit,
        ),
        # Pure copy: read all of x once, write the same number of bytes.
        cost_estimate=pl.CostEstimate(
            flops=0, transcendentals=0, bytes_accessed=2 * total_bytes
        ),
    )(x_flat)

    return x1.reshape(n, 1, h, w), x2.reshape(n, 1, h, w)


# --------------------------------------------------------------------------
# Module path: forward returns the constant 0; split is lazy (no kernel).
# --------------------------------------------------------------------------
def change_predictor_forward(x):
    """Mirrors ChangePredictor.forward: split channels (discarded), return 0."""
    c = x.shape[1]
    assert c == 2, "torch.split(x, 1, dim=1) -> (x1, x2) requires 2 channels"
    x1 = x[:, 0:1]   # lazy XLA slices, never materialized by a kernel
    x2 = x[:, 1:2]
    del x1, x2       # the PyTorch forward discards them
    return 0         # constant Python int, exactly like the reference


class ChangePredictor:
    """Thin wrapper mirroring the nn.Module interface (no parameters)."""

    def __init__(self, n_channels, plot_size):
        self.n_channels = n_channels
        self.plot_size = plot_size

    def __call__(self, x):
        return change_predictor_forward(x)


if __name__ == "__main__":
    key = jax.random.PRNGKey(0)
    k_small, k_big = jax.random.split(key)

    # torch.split(x, 1, dim=1) unpacked into (x1, x2) requires 2 channels.
    x_small = jax.random.normal(k_small, (2, 2, 16, 16), dtype=jnp.float32)

    # Module path: no kernel launched, constant 0 (same as the PyTorch value).
    model = ChangePredictor(n_channels=2, plot_size=16)
    assert model(x_small) == 0

    # Small-input fast path (plain XLA slices).
    a1, a2 = split_channels_pallas(x_small)
    a1, a2 = jax.block_until_ready((a1, a2))
    assert a1.shape == (2, 1, 16, 16) and a2.shape == (2, 1, 16, 16)
    assert jnp.array_equal(a1, x_small[:, 0:1])
    assert jnp.array_equal(a2, x_small[:, 1:2])

    # Pallas path: sublane-aligned batch tiles, 2 "parallel" grid steps,
    # lane-dense copies (H*W = 1024 is a multiple of 128).
    x = jax.random.normal(k_big, (16, 2, 32, 32), dtype=jnp.float32)
    x1, x2 = split_channels_pallas(x, force_pallas=True)
    x1, x2 = jax.block_until_ready((x1, x2))
    assert x1.shape == (16, 1, 32, 32) and x2.shape == (16, 1, 32, 32)
    assert jnp.array_equal(x1, x[:, 0:1])
    assert jnp.array_equal(x2, x[:, 1:2])

    print("KERNEL_OK")
</pallas_src>

<mosaic_0001>
module attributes {stable_mosaic.version = 11 : i64} {
  func.func @_split_channels_kernel(%arg0: i32, %arg1: memref<8x2048xf32, #tpu.memory_space<vmem>>, %arg2: memref<8x1024xf32, #tpu.memory_space<vmem>>, %arg3: memref<8x1024xf32, #tpu.memory_space<vmem>>) attributes {dimension_semantics = [#tpu.dimension_semantics<parallel>], iteration_bounds = array<i64: 2>, scalar_prefetch = 0 : i64, scratch_operands = 0 : i64, tpu.core_type = #tpu.core_type<tc>, window_params = [{transform_indices = @transform_0, window_bounds = array<i64: 8, 2048>}, {transform_indices = @transform_1, window_bounds = array<i64: 8, 1024>}, {transform_indices = @transform_2, window_bounds = array<i64: 8, 1024>}]} {
    %c0 = arith.constant 0 : index
    %c0_0 = arith.constant 0 : index
    %0 = vector.load %arg1[%c0, %c0_0] : memref<8x2048xf32, #tpu.memory_space<vmem>>, vector<8x1024xf32>
    %c0_1 = arith.constant 0 : index
    %c0_2 = arith.constant 0 : index
    %1 = vector.load %arg2[%c0_1, %c0_2] : memref<8x1024xf32, #tpu.memory_space<vmem>>, vector<8x1024xf32>
    tpu.vector_store %arg2[%c0_1, %c0_2], %0 {strides = array<i32>} : memref<8x1024xf32, #tpu.memory_space<vmem>>, vector<8x1024xf32>,
    %c0_3 = arith.constant 0 : index
    %c1024 = arith.constant 1024 : index
    %2 = vector.load %arg1[%c0_3, %c1024] : memref<8x2048xf32, #tpu.memory_space<vmem>>, vector<8x1024xf32>
    %c0_4 = arith.constant 0 : index
    %c0_5 = arith.constant 0 : index
    %3 = vector.load %arg3[%c0_4, %c0_5] : memref<8x1024xf32, #tpu.memory_space<vmem>>, vector<8x1024xf32>
    tpu.vector_store %arg3[%c0_4, %c0_5], %2 {strides = array<i32>} : memref<8x1024xf32, #tpu.memory_space<vmem>>, vector<8x1024xf32>,
    return
  }
  func.func @transform_0(%arg0: i32) -> (i32, i32) {
    %c0_i32 = arith.constant 0 : i32
    %c0_i32_0 = arith.constant 0 : i32
    return %arg0, %c0_i32 : i32, i32
  }
  func.func @transform_1(%arg0: i32) -> (i32, i32) {
    %c0_i32 = arith.constant 0 : i32
    %c0_i32_0 = arith.constant 0 : i32
    return %arg0, %c0_i32 : i32, i32
  }
  func.func @transform_2(%arg0: i32) -> (i32, i32) {
    %c0_i32 = arith.constant 0 : i32
    %c0_i32_0 = arith.constant 0 : i32
    return %arg0, %c0_i32 : i32, i32
  }
}

</mosaic_0001>

<llo_original>
// kernel: tpu_custom_call.1
$region0: #{tpu_custom_call.1}
  #allocation0 [shape = 'u32[]', space=smem, size = 0x4, offset = 0x4, fixed_abs, tag = 'smem constant byte address 0x4 - core index']
  #allocation1 [shape = 'u32[144,128]{1,0:T(1,128)}', space=vmem, size = 0x12000, scoped, tag = 'internal scratch']
  %s0 = inlined_call_operand.hbm [shape: f32[16,2048], index: 0, kind: input, shape index: {}]
  %s1 = inlined_call_operand.hbm [shape: f32[16,1024], index: 1, kind: output, shape index: {0}]
  %s2 = inlined_call_operand.hbm [shape: f32[16,1024], index: 2, kind: output, shape index: {1}]
  %3 = xla_tuple %s1, %s2
  %s4 = sld [smem:[#allocation0]]
  $region49: #{tpu_custom_call.1} parent=0
    _
  %s6 = ssub.s32 1, %s4
  %s7 = scalar_select 0, %s6, %s4
  $region1: #{tpu_custom_call.1} parent=0
    #allocation2 [shape = 'u8[131072]{0}', space=vmem, size = 0x20000, scoped, tag = 'input window, operand 0']
    #allocation3 [shape = 's32[2]{0}', space=sflag, size = 0x8, scoped, tag = 'scoped memory for tpu_custom_call.1']
    #allocation4 [shape = 's32[2]{0}', space=sflag, size = 0x8, scoped, tag = 'scoped memory for tpu_custom_call.1']
    #allocation5 [shape = 'u8[65536]{0}', space=vmem, size = 0x10000, scoped, tag = 'output window, operand 0']
    #allocation6 [shape = 'u8[65536]{0}', space=vmem, size = 0x10000, scoped, tag = 'output window, operand 1']
    #allocation7 [shape = 's32[2]{0}', space=sflag, size = 0x8, scoped, tag = 'scoped memory for tpu_custom_call.1']
    %8 = vsyncpa [#allocation3], 0
    %s9 = scalar_lea.sflag [#allocation3], 1
    %10 = vsyncpa %s9, 0
    %11 = vsyncpa [#allocation4], 0
    %s12 = scalar_lea.sflag [#allocation4], 1
    %13 = vsyncpa %s12, 0
    %14 = vsyncpa [#allocation7], 0
    %s15 = scalar_lea.sflag [#allocation7], 1
    %16 = vsyncpa %s15, 0
    loop: start=0, step=1, limit=4
    $region2: #{tpu_custom_call.1} parent=1 // loop_pre_header
      _
    $region3: #{tpu_custom_call.1} parent=1 // loop_header
      %s18 = sphi 0, %s22
      %p19 = scmp.ge.s32.totalorder %s18, 4
      %s28 = sphi 0, %s30
      %s31 = sphi 0, %s28
      %s32 = sphi 0, %s31
      %s48 = sphi 0, %s32
      %s54 = sphi 0, %s56
      %s57 = sphi 0, %s54
      %s58 = sphi 0, %s57
      %s74 = sphi 0, %s58
      %s80 = sphi 0, %s82
      %s83 = sphi 0, %s80
      %s84 = sphi 0, %s83
      %s100 = sphi 0, %s84
    $region4: #{tpu_custom_call.1} parent=1 // loop_header_branch
      %21 = sbr.rel (%p19) target = $region8
    $region5: #{tpu_custom_call.1} parent=1 // loop_body
      %s23 = ssub.s32 %s18, 1
      %s24 = ssub.s32 %s18, 2
      %s25 = sadd.s32 %s18, 1
      %s26 = ssub.s32 %s18, %s25
      %p27 = scmp.eq.s32.totalorder %s26, 0
      %s29 = sadd.s32 %s28, 1
      %s30 = scalar_select %p27, %s28, %s29
      %p33 = pneg %p27
      %p34 = scmp.eq.s32.totalorder %s18, 1
      %p35 = por %p33, %p34
      %p36 = scmp.ne.s32.totalorder %s28, %s31
      %p37 = scmp.eq.s32.totalorder %s18, 0
      %p38 = por %p36, %p37
      %p39 = scmp.ne.s32.totalorder %s28, %s31
      %p40 = scmp.eq.s32.totalorder %s23, 1
      %p41 = por %p39, %p40
      %p42 = scmp.ne.s32.totalorder %s31, %s32
      %p43 = scmp.eq.s32.totalorder %s23, 0
      %p44 = por %p42, %p43
      %p45 = scmp.ne.s32.totalorder %s31, %s32
      %p46 = scmp.eq.s32.totalorder %s24, 1
      %p47 = por %p45, %p46
      %p49 = scmp.ne.s32.totalorder %s32, %s48
      %p50 = scmp.eq.s32.totalorder %s24, 0
      %p51 = por %p49, %p50
      %s52 = ssub.s32 %s18, %s25
      %p53 = scmp.eq.s32.totalorder %s52, 0
      %s55 = sadd.s32 %s54, 1
      %s56 = scalar_select %p53, %s54, %s55
      %p59 = pneg %p53
      %p60 = scmp.eq.s32.totalorder %s18, 1
      %p61 = por %p59, %p60
      %p62 = scmp.ne.s32.totalorder %s54, %s57
      %p63 = scmp.eq.s32.totalorder %s18, 0
      %p64 = por %p62, %p63
      %p65 = scmp.ne.s32.totalorder %s54, %s57
      %p66 = scmp.eq.s32.totalorder %s23, 1
      %p67 = por %p65, %p66
      %p68 = scmp.ne.s32.totalorder %s57, %s58
      %p69 = scmp.eq.s32.totalorder %s23, 0
      %p70 = por %p68, %p69
      %p71 = scmp.ne.s32.totalorder %s57, %s58
      %p72 = scmp.eq.s32.totalorder %s24, 1
      %p73 = por %p71, %p72
      %p75 = scmp.ne.s32.totalorder %s58, %s74
      %p76 = scmp.eq.s32.totalorder %s24, 0
      %p77 = por %p75, %p76
      %s78 = ssub.s32 %s18, %s25
      %p79 = scmp.eq.s32.totalorder %s78, 0
      %s81 = sadd.s32 %s80, 1
      %s82 = scalar_select %p79, %s80, %s81
      %p85 = pneg %p79
      %p86 = scmp.eq.s32.totalorder %s18, 1
      %p87 = por %p85, %p86
      %p88 = scmp.ne.s32.totalorder %s80, %s83
      %p89 = scmp.eq.s32.totalorder %s18, 0
      %p90 = por %p88, %p89
      %p91 = scmp.ne.s32.totalorder %s80, %s83
      %p92 = scmp.eq.s32.totalorder %s23, 1
      %p93 = por %p91, %p92
      %p94 = scmp.ne.s32.totalorder %s83, %s84
      %p95 = scmp.eq.s32.totalorder %s23, 0
      %p96 = por %p94, %p95
      %p97 = scmp.ne.s32.totalorder %s83, %s84
      %p98 = scmp.eq.s32.totalorder %s24, 1
      %p99 = por %p97, %p98
      %p101 = scmp.ne.s32.totalorder %s84, %s100
      %p102 = scmp.eq.s32.totalorder %s24, 0
      %p103 = por %p101, %p102
      %p104 = scmp.le.s32.totalorder 1, %s18
      %p105 = scmp.lt.s32.totalorder %s18, 3
      %p106 = pnand %p104, %p105
      %p107 = pneg %p106
      // Predicated region
      $region9: #{tpu_custom_call.1} parent=5 // pred_check
        _
      $region10: #{tpu_custom_call.1} parent=5 // pred_check_branch
        %109 = sbr.rel (%p106) target = $region12
      $region11: #{tpu_custom_call.1} parent=5 // pred_region
        %s110 = ssub.s32 %s18, 1
      $region12: #{tpu_custom_call.1} parent=5 // pred_fallthru
        _
      %p111 = scmp.lt.s32.totalorder %s18, 2
      // Predicated region
      $region13: #{tpu_custom_call.1} parent=5 // pred_check
        %p112 = pneg %p111
      $region14: #{tpu_custom_call.1} parent=5 // pred_check_branch
        %114 = sbr.rel (%p112) target = $region16
      $region15: #{tpu_custom_call.1} parent=5 // pred_region
        // Predicated region
        $region17: #{tpu_custom_call.1} parent=15 // pred_check
          %p115 = pneg %p38
        $region18: #{tpu_custom_call.1} parent=15 // pred_check_branch
          %117 = sbr.rel (%p115) target = $region20
        $region19: #{tpu_custom_call.1} parent=15 // pred_region
          %s118 = sand.u32 %s28, 1
          %s119 = scalar_lea.sflag [#allocation3], %s118
          %s120 = sand.u32 %s28, 1
          %s121 = smul.addr %s120, 128
          %s122 = scalar_lea.vmem [#allocation2], %s121
          %s124 = ssub.s32 2048, 2048
          %125 = vsyncadd %s119, %s124
          %s126 = smul.addr %s18, 16
          %s127 = smul.addr %s126, 128
          %s128 = scalar_lea.hbm %s0, %s127
          %s130 = sshll.u32 %s122, 4
          %s131 = int_to_ptr.vmem [resolvable:$true] %s130
          %133 = dma.hbm_to_vmem [thread:$0]  %s128, 2048, %s131, %s119
        $region20: #{tpu_custom_call.1} parent=15 // pred_fallthru
          _
      $region16: #{tpu_custom_call.1} parent=5 // pred_fallthru
        _
      %p134 = scmp.le.s32.totalorder 1, %s18
      %p135 = scmp.lt.s32.totalorder %s18, 3
      %p136 = pnand %p134, %p135
      %p137 = pneg %p136
      // Predicated region
      $region21: #{tpu_custom_call.1} parent=5 // pred_check
        _
      $region22: #{tpu_custom_call.1} parent=5 // pred_check_branch
        %139 = sbr.rel (%p136) target = $region24
      $region23: #{tpu_custom_call.1} parent=5 // pred_region
        %s140 = ssub.s32 %s18, 1
        %s141 = sand.u32 %s31, 1
        %s142 = scalar_lea.sflag [#allocation3], %s141
        %s143 = sand.u32 %s31, 1
        %s144 = smul.addr %s143, 128
        %s145 = scalar_lea.vmem [#allocation2], %s144
        // Predicated region
        $region25: #{tpu_custom_call.1} parent=23 // pred_check
          %p146 = pneg %p44
        $region26: #{tpu_custom_call.1} parent=23 // pred_check_branch
          %148 = sbr.rel (%p146) target = $region28
        $region27: #{tpu_custom_call.1} parent=23 // pred_region
          %149 = dma.done %s142, 2048
        $region28: #{tpu_custom_call.1} parent=23 // pred_fallthru
          _
        %s150 = sand.u32 %s31, 1
        %s151 = scalar_lea.sflag [#allocation3], %s150
        %s152 = sand.u32 %s31, 1
        %s153 = smul.addr %s152, 128
        %s154 = scalar_lea.vmem [#allocation2], %s153
        %p155 = pneg %p44
        %p156 = pneg %p41
        %p157 = pneg %p70
        %p158 = pneg %p67
        %s159 = sand.u32 %s57, 1
        %s160 = scalar_lea.sflag [#allocation4], %s159
        %s161 = sand.u32 %s57, 1
        %s162 = smul.addr %s161, 64
        %s163 = scalar_lea.vmem [#allocation5], %s162
        %p164 = pneg %p96
        %p165 = pneg %p93
        %s166 = sand.u32 %s83, 1
        %s167 = scalar_lea.sflag [#allocation7], %s166
        %s168 = sand.u32 %s83, 1
        %s169 = smul.addr %s168, 64
        %s170 = scalar_lea.vmem [#allocation6], %s169
        %v171 = vld [vmem:[%s145] sm:$0xff]
        %v172 = vld [vmem:[%s145 + $0x8] sm:$0xff]
        %v173 = vld [vmem:[%s145 + $0x10] sm:$0xff]
        %v174 = vld [vmem:[%s145 + $0x18] sm:$0xff]
        %v175 = vld [vmem:[%s145 + $0x20] sm:$0xff]
        %v176 = vld [vmem:[%s145 + $0x28] sm:$0xff]
        %v177 = vld [vmem:[%s145 + $0x30] sm:$0xff]
        %v178 = vld [vmem:[%s145 + $0x38] sm:$0xff]
        %179 = vst [vmem:[%s163] sm:$0xff] %v171
        %180 = vst [vmem:[%s163 + $0x8] sm:$0xff] %v172
        %181 = vst [vmem:[%s163 + $0x10] sm:$0xff] %v173
        %182 = vst [vmem:[%s163 + $0x18] sm:$0xff] %v174
        %183 = vst [vmem:[%s163 + $0x20] sm:$0xff] %v175
        %184 = vst [vmem:[%s163 + $0x28] sm:$0xff] %v176
        %185 = vst [vmem:[%s163 + $0x30] sm:$0xff] %v177
        %186 = vst [vmem:[%s163 + $0x38] sm:$0xff] %v178
        %v187 = vld [vmem:[%s145 + $0x40] sm:$0xff]
        %v188 = vld [vmem:[%s145 + $0x48] sm:$0xff]
        %v189 = vld [vmem:[%s145 + $0x50] sm:$0xff]
        %v190 = vld [vmem:[%s145 + $0x58] sm:$0xff]
        %v191 = vld [vmem:[%s145 + $0x60] sm:$0xff]
        %v192 = vld [vmem:[%s145 + $0x68] sm:$0xff]
        %v193 = vld [vmem:[%s145 + $0x70] sm:$0xff]
        %v194 = vld [vmem:[%s145 + $0x78] sm:$0xff]
        %195 = vst [vmem:[%s170] sm:$0xff] %v187
        %196 = vst [vmem:[%s170 + $0x8] sm:$0xff] %v188
        %197 = vst [vmem:[%s170 + $0x10] sm:$0xff] %v189
        %198 = vst [vmem:[%s170 + $0x18] sm:$0xff] %v190
        %199 = vst [vmem:[%s170 + $0x20] sm:$0xff] %v191
        %200 = vst [vmem:[%s170 + $0x28] sm:$0xff] %v192
        %201 = vst [vmem:[%s170 + $0x30] sm:$0xff] %v193
        %202 = vst [vmem:[%s170 + $0x38] sm:$0xff] %v194
        %s203 = sand.u32 %s57, 1
        %s204 = scalar_lea.sflag [#allocation4], %s203
        %s205 = sand.u32 %s57, 1
        %s206 = smul.addr %s205, 64
        %s207 = scalar_lea.vmem [#allocation5], %s206
        %s208 = sand.u32 %s83, 1
        %s209 = scalar_lea.sflag [#allocation7], %s208
        %s210 = sand.u32 %s83, 1
        %s211 = smul.addr %s210, 64
        %s212 = scalar_lea.vmem [#allocation6], %s211
        // Predicated region
        $region29: #{tpu_custom_call.1} parent=23 // pred_check
          %p213 = pneg %p67
        $region30: #{tpu_custom_call.1} parent=23 // pred_check_branch
          %215 = sbr.rel (%p213) target = $region32
        $region31: #{tpu_custom_call.1} parent=23 // pred_region
          %s217 = ssub.s32 1024, 1024
          %218 = vsyncadd %s204, %s217
          %s219 = smul.addr %s23, 8
          %s220 = smul.addr %s219, 128
          %s221 = scalar_lea.hbm %s1, %s220
          %s223 = sshll.u32 %s207, 4
          %s224 = int_to_ptr.vmem [resolvable:$true] %s223
          %226 = dma.vmem_to_hbm [thread:$0]  %s224, 1024, %s221, %s204
        $region32: #{tpu_custom_call.1} parent=23 // pred_fallthru
          _
        // Predicated region
        $region33: #{tpu_custom_call.1} parent=23 // pred_check
          %p227 = pneg %p93
        $region34: #{tpu_custom_call.1} parent=23 // pred_check_branch
          %229 = sbr.rel (%p227) target = $region36
        $region35: #{tpu_custom_call.1} parent=23 // pred_region
          %s231 = ssub.s32 1024, 1024
          %232 = vsyncadd %s209, %s231
          %s233 = smul.addr %s23, 8
          %s234 = smul.addr %s233, 128
          %s235 = scalar_lea.hbm %s2, %s234
          %s237 = sshll.u32 %s212, 4
          %s238 = int_to_ptr.vmem [resolvable:$true] %s237
          %240 = dma.vmem_to_hbm [thread:$0]  %s238, 1024, %s235, %s209
        $region36: #{tpu_custom_call.1} parent=23 // pred_fallthru
          _
      $region24: #{tpu_custom_call.1} parent=5 // pred_fallthru
        _
      %p241 = scmp.le.s32.totalorder 2, %s18
      // Predicated region
      $region37: #{tpu_custom_call.1} parent=5 // pred_check
        %p242 = pneg %p241
      $region38: #{tpu_custom_call.1} parent=5 // pred_check_branch
        %244 = sbr.rel (%p242) target = $region40
      $region39: #{tpu_custom_call.1} parent=5 // pred_region
        %s245 = ssub.s32 %s18, 2
        // Predicated region
        $region41: #{tpu_custom_call.1} parent=39 // pred_check
          %p246 = pneg %p73
        $region42: #{tpu_custom_call.1} parent=39 // pred_check_branch
          %248 = sbr.rel (%p246) target = $region44
        $region43: #{tpu_custom_call.1} parent=39 // pred_region
          %s249 = sand.u32 %s58, 1
          %s250 = scalar_lea.sflag [#allocation4], %s249
          %s251 = sand.u32 %s58, 1
          %s252 = smul.addr %s251, 64
          %s253 = scalar_lea.vmem [#allocation5], %s252
          %254 = dma.done %s250, 1024
        $region44: #{tpu_custom_call.1} parent=39 // pred_fallthru
          _
        // Predicated region
        $region45: #{tpu_custom_call.1} parent=39 // pred_check
          %p255 = pneg %p99
        $region46: #{tpu_custom_call.1} parent=39 // pred_check_branch
          %257 = sbr.rel (%p255) target = $region48
        $region47: #{tpu_custom_call.1} parent=39 // pred_region
          %s258 = sand.u32 %s84, 1
          %s259 = scalar_lea.sflag [#allocation7], %s258
          %s260 = sand.u32 %s84, 1
          %s261 = smul.addr %s260, 64
          %s262 = scalar_lea.vmem [#allocation6], %s261
          %263 = dma.done %s259, 1024
        $region48: #{tpu_custom_call.1} parent=39 // pred_fallthru
          _
      $region40: #{tpu_custom_call.1} parent=5 // pred_fallthru
        _
    $region6: #{tpu_custom_call.1} parent=1 // loop_footer
      %s22 = sadd.s32 1, %s18
    $region7: #{tpu_custom_call.1} parent=1 // loop_footer_branch
      %17 = sbr.rel target = $region3
    $region8: #{tpu_custom_call.1} parent=1 // loop_exit
      _
    %264 = vsyncpa [#allocation3], 1
    %s265 = scalar_lea.sflag [#allocation3], 1
    %266 = vsyncpa %s265, 1
    %267 = vsyncpa [#allocation4], 1
    %s268 = scalar_lea.sflag [#allocation4], 1
    %269 = vsyncpa %s268, 1
    %270 = vsyncpa [#allocation7], 1
    %s271 = scalar_lea.sflag [#allocation7], 1
    %272 = vsyncpa %s271, 1

</llo_original>
